<compile_context>
chip_gen: v7x
topology: tpu7x:2x2x1
jax: 0.10.0
libtpu: 0.0.40
codegen_flags: <defaults>
</compile_context>

<pallas_src>
import functools

import jax
import jax.numpy as jnp
from jax import lax
from jax.experimental import pallas as pl
from jax.experimental.pallas import tpu as pltpu

_FEAT_RAW = 3 * 3 + 1          # flattened backbone coords + confidence
_FEAT_PAD = 16                 # padded to a sublane multiple
_VMEM = pltpu.MemorySpace.VMEM
_SMEM = pltpu.MemorySpace.SMEM


# ----------------------------------------------------------------------------- kernels
def _encode_kernel(x_ref, mask_ref, w_ref, b_ref, o_ref):
    # x: (T, F) token features, mask: (T, 1) 1.0 where padded, w: (F, D), b: (1, D)
    h = jnp.dot(x_ref[...], w_ref[...], preferred_element_type=jnp.float32)
    h = jnp.tanh(h + b_ref[...])
    # zero-out padded positions (padding_mask == True in the torch model)
    o_ref[...] = jnp.where(mask_ref[...] > 0.5, 0.0, h).astype(o_ref.dtype)


def _scores_kernel(q_ref, c_ref, o_ref):
    # q: (n1, D), c: (n2, D) -> scores (n1, n2) == torch.matmul(q, c.T)
    # contract both last dims -> feeds MXU directly, no transpose/layout copy.
    o_ref[...] = lax.dot_general(
        q_ref[...], c_ref[...],
        dimension_numbers=(((1,), (1,)), ((), ())),
        preferred_element_type=jnp.float32,
    )


def _fused_metrics_kernel(q_ref, c_ref, loss_ref, correct_ref, *, swap):
    """Compute sim matrix once in VMEM; emit NLL loss + correct-prediction count.

    swap (static): True iff n1 > n2, i.e. the torch get_loss branch that scores (c, q).
    Loss then operates on s.T, whose row log-softmax equals the column log-softmax of s.
    Accuracy always operates on s with labels arange(n1) (torch get_accuracy: no swap).
    """
    q = q_ref[...].astype(jnp.float32)
    c = c_ref[...].astype(jnp.float32)
    s = lax.dot_general(                      # s[i, j] = <q_i, c_j>, shape (n1, n2)
        q, c, dimension_numbers=(((1,), (1,)), ((), ())),
        preferred_element_type=jnp.float32,
    )
    n1, n2 = s.shape
    row = lax.broadcasted_iota(jnp.int32, (n1, n2), 0)
    col = lax.broadcasted_iota(jnp.int32, (n1, n2), 1)
    on_diag = row == col

    # ---- accuracy: argmax over rows of s (log_softmax is monotone per row).
    # first-max index (torch.max tie behavior) compared to label = row index.
    row_max = jnp.max(s, axis=1, keepdims=True)
    first_idx = jnp.min(jnp.where(s == row_max, col, n2), axis=1, keepdims=True)  # (n1,1)
    row_idx = lax.broadcasted_iota(jnp.int32, (n1, 1), 0)
    correct_ref[0, 0] = jnp.sum((first_idx == row_idx).astype(jnp.int32))

    # ---- loss: mean_i( -log_softmax(sim_loss, axis=1)[i, i] )
    if swap:
        # sim_loss = s.T, shape (n2, n1); row-softmax of s.T == column-softmax of s.
        col_max = jnp.max(s, axis=0, keepdims=True)
        lse = col_max + jnp.log(jnp.sum(jnp.exp(s - col_max), axis=0, keepdims=True))
        n_loss = n2
    else:
        # reuse row_max from the accuracy path.
        lse = row_max + jnp.log(jnp.sum(jnp.exp(s - row_max), axis=1, keepdims=True))
        n_loss = n1
    logp = s - lse
    diag_sum = jnp.sum(jnp.where(on_diag, logp, 0.0))
    loss_ref[0, 0] = -diag_sum / n_loss


# --------------------------------------------------------------------------- wrappers
def _encode(feats, pad_mask, w, b):
    T, _ = feats.shape
    D = w.shape[1]
    return pl.pallas_call(
        _encode_kernel,
        out_shape=jax.ShapeDtypeStruct((T, D), jnp.float32),
        in_specs=[pl.BlockSpec(memory_space=_VMEM)] * 4,
        out_specs=pl.BlockSpec(memory_space=_VMEM),
    )(feats, pad_mask, w, b)


def dot_product_scores(q_vectors, ctx_vectors):
    """n1 x D, n2 x D -> n1 x n2 (kept for API parity with the torch helper)."""
    n1 = q_vectors.shape[0]
    n2 = ctx_vectors.shape[0]
    return pl.pallas_call(
        _scores_kernel,
        out_shape=jax.ShapeDtypeStruct((n1, n2), jnp.float32),
        in_specs=[pl.BlockSpec(memory_space=_VMEM)] * 2,
        out_specs=pl.BlockSpec(memory_space=_VMEM),
    )(q_vectors, ctx_vectors)


def _fused_metrics(q_embedding, c_embedding, swap):
    loss, correct = pl.pallas_call(
        functools.partial(_fused_metrics_kernel, swap=swap),
        out_shape=(
            jax.ShapeDtypeStruct((1, 1), jnp.float32),
            jax.ShapeDtypeStruct((1, 1), jnp.int32),
        ),
        in_specs=[pl.BlockSpec(memory_space=_VMEM)] * 2,
        out_specs=(
            pl.BlockSpec(memory_space=_SMEM),
            pl.BlockSpec(memory_space=_SMEM),
        ),
    )(q_embedding, c_embedding)
    return loss[0, 0], correct[0, 0]


class MyRepresentation:
    """JAX/Pallas port of the torch MyRepresentation module (batch size B = 1)."""

    def __init__(self, hidden_dim, key):
        kw, kb = jax.random.split(key)
        # deterministic stand-in encoder parameters (feature dim padded to 16;
        # the padded feature columns are zero, so the extra weight rows are inert).
        self.w = jax.random.normal(kw, (_FEAT_PAD, hidden_dim), jnp.float32) * 0.1
        self.b = jax.random.normal(kb, (1, hidden_dim), jnp.float32) * 0.01

    @staticmethod
    def _features(coords, confidence):
        # coords: (1, T, 3, 3), confidence: (1, T) -> (T, 16) f32, zero-padded lanes.
        T = coords.shape[1]
        return jnp.concatenate(
            [
                coords[0].reshape(T, 9).astype(jnp.float32),
                confidence[0].reshape(T, 1).astype(jnp.float32),
                jnp.zeros((T, _FEAT_PAD - _FEAT_RAW), jnp.float32),
            ],
            axis=1,
        )

    def forward_once(self, coords, padding_mask, confidence):
        # Single-structure encode (API parity); forward() uses the fused two-structure path.
        T = coords.shape[1]
        feats = self._features(coords, confidence)
        mask = padding_mask[0].reshape(T, 1).astype(jnp.float32)
        enc = _encode(feats, mask, self.w, self.b)          # (T, D) ~ encoder_out[0][:, 0]
        return enc[1:-1]                                    # drop first/last token

    def forward(self, batch):
        structure1, structure2 = batch
        coords1, conf1, pad1 = structure1[0], structure1[1], structure1[4]
        coords2, conf2, pad2 = structure2[0], structure2[1], structure2[4]
        T1, T2 = coords1.shape[1], coords2.shape[1]
        # One encode launch for both structures: concatenate rows.
        feats = jnp.concatenate(
            [self._features(coords1, conf1), self._features(coords2, conf2)], axis=0
        )
        mask = jnp.concatenate(
            [pad1[0].reshape(T1, 1), pad2[0].reshape(T2, 1)], axis=0
        ).astype(jnp.float32)
        enc = _encode(feats, mask, self.w, self.b)          # (T1+T2, D)
        q_embedding = enc[1:T1 - 1]                         # structure1 tokens [1:-1]
        c_embedding = enc[T1 + 1:T1 + T2 - 1]               # structure2 tokens [1:-1]
        return (q_embedding, c_embedding)

    # Fused scoring: one pallas_call, one matmul, sim_mx never leaves VMEM.
    def get_loss_and_accuracy(self, embedding):
        q_embedding, c_embedding = embedding
        swap = q_embedding.shape[0] > c_embedding.shape[0]  # static, matches torch branch
        loss, correct = _fused_metrics(q_embedding, c_embedding, swap)
        # accuracy total = sim_mx.shape[0] with sim_mx = dot_product_scores(q, c)
        return loss, correct, q_embedding.shape[0]

    def get_loss(self, embedding):
        loss, _, _ = self.get_loss_and_accuracy(embedding)
        return loss

    def get_accuracy(self, embedding):
        _, correct, total = self.get_loss_and_accuracy(embedding)
        return (correct, total)


# ------------------------------------------------------------------------------- main
if __name__ == "__main__":
    key = jax.random.PRNGKey(0)
    k_model, k1, k2, k3, k4 = jax.random.split(key, 5)

    T1, T2, D = 10, 12, 128   # D lane-dense (multiple of 128)

    model = MyRepresentation(D, k_model)

    coords1 = jax.random.normal(k1, (1, T1, 3, 3), jnp.float32)
    conf1 = jax.random.uniform(k2, (1, T1), jnp.float32)
    pad1 = jnp.zeros((1, T1), jnp.bool_)
    structure1 = (coords1, conf1, None, None, pad1)

    coords2 = jax.random.normal(k3, (1, T2, 3, 3), jnp.float32)
    conf2 = jax.random.uniform(k4, (1, T2), jnp.float32)
    pad2 = jnp.zeros((1, T2), jnp.bool_)
    structure2 = (coords2, conf2, None, None, pad2)

    q_emb, c_emb = model.forward((structure1, structure2))
    loss, correct, total = model.get_loss_and_accuracy((q_emb, c_emb))

    jax.block_until_ready((q_emb, c_emb, loss, correct))
    assert q_emb.shape == (T1 - 2, D) and c_emb.shape == (T2 - 2, D)
    assert bool(jnp.isfinite(loss))
    assert 0 <= int(correct) <= total
    print("KERNEL_OK")
</pallas_src>

<mosaic_0001>
module attributes {stable_mosaic.version = 11 : i64} {
  func.func @_encode_kernel(%arg0: memref<22x16xf32, #tpu.memory_space<vmem>>, %arg1: memref<22x1xf32, #tpu.memory_space<vmem>>, %arg2: memref<16x128xf32, #tpu.memory_space<vmem>>, %arg3: memref<1x128xf32, #tpu.memory_space<vmem>>, %arg4: memref<22x128xf32, #tpu.memory_space<vmem>>) attributes {dimension_semantics = [], scalar_prefetch = 0 : i64, scratch_operands = 0 : i64, tpu.core_type = #tpu.core_type<tc>} {
    %c0 = arith.constant 0 : index
    %c0_0 = arith.constant 0 : index
    %0 = vector.load %arg0[%c0, %c0_0] : memref<22x16xf32, #tpu.memory_space<vmem>>, vector<22x16xf32>
    %c0_1 = arith.constant 0 : index
    %c0_2 = arith.constant 0 : index
    %1 = vector.load %arg2[%c0_1, %c0_2] : memref<16x128xf32, #tpu.memory_space<vmem>>, vector<16x128xf32>
    %cst = arith.constant dense<0.000000e+00> : vector<22x128xf32>
    %2 = tpu.matmul %0, %1, %cst {dimension_numbers = #tpu.dot_dimension_numbers<[1], [0], [0], [1], [0, 0, 1, 1], [], []>} : vector<22x16xf32>, vector<16x128xf32>, vector<22x128xf32> -> vector<22x128xf32>
    %c0_3 = arith.constant 0 : index
    %c0_4 = arith.constant 0 : index
    %3 = vector.load %arg3[%c0_3, %c0_4] : memref<1x128xf32, #tpu.memory_space<vmem>>, vector<1x128xf32>
    %4 = vector.broadcast %3 : vector<1x128xf32> to vector<22x128xf32>
    %5 = arith.addf %2, %4 : vector<22x128xf32>
    %6 = math.tanh %5 : vector<22x128xf32>
    %c0_5 = arith.constant 0 : index
    %c0_6 = arith.constant 0 : index
    %7 = vector.load %arg1[%c0_5, %c0_6] : memref<22x1xf32, #tpu.memory_space<vmem>>, vector<22x1xf32>
    %cst_7 = arith.constant 5.000000e-01 : f32
    %8 = vector.broadcast %cst_7 : f32 to vector<22x1xf32>
    %9 = arith.cmpf ogt, %7, %8 : vector<22x1xf32>
    %cst_8 = arith.constant 0.000000e+00 : f32
    %10 = vector.shape_cast %9 : vector<22x1xi1> to vector<22x1xi1>
    %11 = vector.broadcast %10 : vector<22x1xi1> to vector<22x128xi1>
    %12 = vector.broadcast %cst_8 : f32 to vector<22x128xf32>
    %13 = arith.select %11, %12, %6 : vector<22x128xi1>, vector<22x128xf32>
    %c0_9 = arith.constant 0 : index
    %c0_10 = arith.constant 0 : index
    %14 = vector.load %arg4[%c0_9, %c0_10] : memref<22x128xf32, #tpu.memory_space<vmem>>, vector<22x128xf32>
    tpu.vector_store %arg4[%c0_9, %c0_10], %13 {strides = array<i32>} : memref<22x128xf32, #tpu.memory_space<vmem>>, vector<22x128xf32>,
    return
  }
}

</mosaic_0001>

<llo_original>
// kernel: tpu_custom_call.1
$region0: #{tpu_custom_call.1}
  #allocation0 [shape = 'u32[]', space=smem, size = 0x4, offset = 0x4, fixed_abs, tag = 'smem constant byte address 0x4 - core index']
  #allocation1 [shape = 'u32[144,128]{1,0:T(1,128)}', space=vmem, size = 0x12000, scoped, tag = 'internal scratch']
  %s0 = inlined_call_operand.vmem [shape: f32[22,16], index: 0, kind: input, shape index: {}]
  %s1 = inlined_call_operand.vmem [shape: f32[22,1], index: 1, kind: input, shape index: {}]
  %s2 = inlined_call_operand.vmem [shape: f32[16,128], index: 2, kind: input, shape index: {}]
  %s3 = inlined_call_operand.vmem [shape: f32[1,128], index: 3, kind: input, shape index: {}]
  %s4 = inlined_call_operand.hbm [shape: f32[22,128], index: 4, kind: output, shape index: {}]
  %s5 = sld [smem:[#allocation0]]
  $region26: #{tpu_custom_call.1} parent=0
    _
  %s7 = ssub.s32 1, %s5
  %s8 = scalar_select 0, %s7, %s5
  $region1: #{tpu_custom_call.1} parent=0
    #allocation2 [shape = 'u8[12288]{0}', space=vmem, size = 0x3000, scoped, tag = 'output window, operand 0, single buffered']
    #allocation3 [shape = 's32[1]{0}', space=sflag, size = 0x4, scoped, tag = 'scoped memory for tpu_custom_call.1']
    %9 = vsyncpa [#allocation3], 0
    // Predicated region
    $region2: #{tpu_custom_call.1} parent=1 // pred_check
      _
    $region3: #{tpu_custom_call.1} parent=1 // pred_check_branch
      %11 = sbr.rel (0) target = $region5
    $region4: #{tpu_custom_call.1} parent=1 // pred_region
      _
    $region5: #{tpu_custom_call.1} parent=1 // pred_fallthru
      _
    // Predicated region
    $region6: #{tpu_custom_call.1} parent=1 // pred_check
      _
    $region7: #{tpu_custom_call.1} parent=1 // pred_check_branch
      %13 = sbr.rel (0) target = $region9
    $region8: #{tpu_custom_call.1} parent=1 // pred_region
      _
    $region9: #{tpu_custom_call.1} parent=1 // pred_fallthru
      _
    // Predicated region
    $region10: #{tpu_custom_call.1} parent=1 // pred_check
      _
    $region11: #{tpu_custom_call.1} parent=1 // pred_check_branch
      %15 = sbr.rel (0) target = $region13
    $region12: #{tpu_custom_call.1} parent=1 // pred_region
      _
    $region13: #{tpu_custom_call.1} parent=1 // pred_fallthru
      _
    // Predicated region
    $region14: #{tpu_custom_call.1} parent=1 // pred_check
      _
    $region15: #{tpu_custom_call.1} parent=1 // pred_check_branch
      %17 = sbr.rel (0) target = $region17
    $region16: #{tpu_custom_call.1} parent=1 // pred_region
      _
    $region17: #{tpu_custom_call.1} parent=1 // pred_fallthru
      _
    %v18 = vld [vmem:[%s0] sm:$0xff]
    %v19 = vld [vmem:[%s0 + $0x8] sm:$0xff]
    %v20 = vld [vmem:[%s0 + $0x10] sm:$0x3f]
    %v21 = vld [vmem:[%s2] sm:$0xff]
    %v22 = vld [vmem:[%s2 + $0x8] sm:$0xff]
    %v23 = vld [vmem:[%s3] sm:$0x1]
    %v25 = vlaneseq
    %v26 = vshrl.u32 %v25, 7
    %v27 = vsub.s32 0, %v26
    %v28 = vrot.slane %v23, %v27
    %vm30 = vcmask 130048
    %v32 = vsel %vm30, %v18, 0
    %v35 = vsel %vm30, %v19, 0
    %v38 = vsel %vm30, %v20, 0
    %40 = vmatprep.subr.mxu0 0.0
    %41 = vmatpush1.msra.mxu0 %v21
    %42 = vmatprep.subr.mxu0 0.0
    %43 = vmatpush1.msra.mxu0 %v22
    %44 = vmatprep.subr.mxu0 0.0
    %45 = vmatpush1.msra.mxu0 0.0
    %46 = vmatprep.subr.mxu0 0.0
    %47 = vmatpush1.msra.mxu0 0.0
    %48 = vmatprep.subr.mxu0 0.0
    %49 = vmatpush1.msra.mxu0 0.0
    %50 = vmatprep.subr.mxu0 0.0
    %51 = vmatpush1.msra.mxu0 0.0
    %52 = vmatprep.subr.mxu0 0.0
    %53 = vmatpush1.msra.mxu0 0.0
    %54 = vmatprep.subr.mxu0 0.0
    %55 = vmatpush1.msra.mxu0 0.0
    %56 = vmatprep.subr.mxu0 0.0
    %57 = vmatpush1.msra.mxu0 0.0
    %58 = vmatprep.subr.mxu0 0.0
    %59 = vmatpush1.msra.mxu0 0.0
    %60 = vmatprep.subr.mxu0 0.0
    %61 = vmatpush1.msra.mxu0 0.0
    %62 = vmatprep.subr.mxu0 0.0
    %63 = vmatpush1.msra.mxu0 0.0
    %64 = vmatprep.subr.mxu0 0.0
    %65 = vmatpush1.msra.mxu0 0.0
    %66 = vmatprep.subr.mxu0 0.0
    %67 = vmatpush1.msra.mxu0 0.0
    %68 = vmatprep.subr.mxu0 0.0
    %69 = vmatpush1.msra.mxu0 0.0
    %70 = vmatprep.subr.mxu0 0.0
    %71 = vmatpush1.msra.mxu0 0.0
    %72 = vmatprep.subr.mxu0 0.0
    %73 = vmatpush1.msra.mxu0 0.0
    %74 = vmatprep.subr.mxu0 0.0
    %75 = vmatpush1.msra.mxu0 0.0
    %76 = vmatprep.subr.mxu0 0.0
    %77 = vmatpush1.msra.mxu0 0.0
    %78 = vmatprep.subr.mxu0 0.0
    %79 = vmatpush1.msra.mxu0 0.0
    %80 = vmatprep.subr.mxu0 0.0
    %81 = vmatpush1.msra.mxu0 0.0
    %82 = vmatprep.subr.mxu0 0.0
    %83 = vmatpush1.msra.mxu0 0.0
    %84 = vmatprep.subr.mxu0 0.0
    %85 = vmatpush1.msra.mxu0 0.0
    %86 = vmatprep.subr.mxu0 0.0
    %87 = vmatpush1.msra.mxu0 0.0
    %88 = vmatprep.subr.mxu0 0.0
    %89 = vmatpush1.msra.mxu0 0.0
    %90 = vmatprep.subr.mxu0 0.0
    %91 = vmatpush1.msra.mxu0 0.0
    %92 = vmatprep.subr.mxu0 0.0
    %93 = vmatpush1.msra.mxu0 0.0
    %94 = vmatprep.subr.mxu0 0.0
    %95 = vmatpush1.msra.mxu0 0.0
    %96 = vmatprep.subr.mxu0 0.0
    %97 = vmatpush1.msra.mxu0 0.0
    %98 = vmatprep.subr.mxu0 0.0
    %99 = vmatpush1.msra.mxu0 0.0
    %100 = vmatprep.subr.mxu0 0.0
    %101 = vmatpush1.msra.mxu0 0.0
    %102 = vmatprep.subr.mxu0 0.0
    %103 = vmatpush1.msra.mxu0 0.0
    %104 = vmatprep.mubr.f32.mxu0 0.0
    %105 = vmatmul.mubr.f32.gmra.mrb[0].mxu0 %v32
    %v106 = vpop.f32.mrb[0].mxu0
    %v107 = vadd.f32 %v28, %v106
    %v108 = vpop.f32.mrb[0].mxu0
    %109 = vmatprep.mubr.f32.mxu0 0.0
    %110 = vmatmul.mubr.f32.gmra.mrb[0].mxu0 %v35
    %v111 = vpop.f32.mrb[0].mxu0
    %v112 = vadd.f32 %v28, %v111
    %v113 = vpop.f32.mrb[0].mxu0
    %114 = vmatprep.mubr.f32.mxu0 0.0
    %115 = vmatmul.mubr.f32.gmra.mrb[0].mxu0 %v38
    %v116 = vpop.f32.mrb[0].mxu0
    %v117 = vadd.f32 %v28, %v116
    %v118 = vpop.f32.mrb[0].mxu0
    %119 = vdwg.mxu0
    %v120 = vtanh.pop %v107
    %v121 = vtanh.pop %v112
    %v122 = vtanh.pop %v117
    %v123 = vld [vmem:[%s1] sm:$0xff]
    %v124 = vld [vmem:[%s1 + $0x8] sm:$0xff]
    %v125 = vld [vmem:[%s1 + $0x10] sm:$0x3f]
    %vm126 = vcmp.gt.f32.partialorder %v123, 0.5
    %vm127 = vcmp.gt.f32.partialorder %v124, 0.5
    %vm128 = vcmp.gt.f32.partialorder %v125, 0.5
    %v129 = vsel %vm126, 1, 0
    %v130 = vsel %vm127, 1, 0
    %v131 = vsel %vm128, 1, 0
    %132 = vset.pattern.permute.xlu0 0
    %133 = vperm.xlu0 %132, %v129
    %v134 = vpop.permute.xlu0 %133
    %135 = vset.pattern.permute.xlu0 0
    %136 = vperm.xlu0 %135, %v130
    %v137 = vpop.permute.xlu0 %136
    %138 = vset.pattern.permute.xlu0 0
    %139 = vperm.xlu0 %138, %v131
    %v140 = vpop.permute.xlu0 %139
    %vm141 = vcmp.eq.s32.totalorder %v134, 1
    %vm142 = vcmp.eq.s32.totalorder %v137, 1
    %vm143 = vcmp.eq.s32.totalorder %v140, 1
    %v144 = vsel %vm141, 0.0, %v120
    %v145 = vsel %vm142, 0.0, %v121
    %v146 = vsel %vm143, 0.0, %v122
    %147 = vst [vmem:[#allocation2] sm:$0xff] %v144
    %148 = vst [vmem:[#allocation2 + $0x8] sm:$0xff] %v145
    %149 = vst [vmem:[#allocation2 + $0x10] sm:$0x3f] %v146
    // Predicated region
    $region18: #{tpu_custom_call.1} parent=1 // pred_check
      _
    $region19: #{tpu_custom_call.1} parent=1 // pred_check_branch
      %151 = sbr.rel (0) target = $region21
    $region20: #{tpu_custom_call.1} parent=1 // pred_region
      %s153 = ssub.s32 384, 384
      %154 = vsyncadd [#allocation3], %s153
      %s155 = sshll.u32 [#allocation2], 4
      %s156 = int_to_ptr.vmem [resolvable:$true] %s155
      %161 = dma.vmem_to_hbm [thread:$0]  %s156, 384, %s4, [#allocation3], 128, 128, 8
    $region21: #{tpu_custom_call.1} parent=1 // pred_fallthru
      _
    // Predicated region
    $region22: #{tpu_custom_call.1} parent=1 // pred_check
      _
    $region23: #{tpu_custom_call.1} parent=1 // pred_check_branch
      %163 = sbr.rel (0) target = $region25
    $region24: #{tpu_custom_call.1} parent=1 // pred_region
      %164 = dma.done [#allocation3], 384
    $region25: #{tpu_custom_call.1} parent=1 // pred_fallthru
      _
    %165 = vsyncpa [#allocation3], 1

</llo_original>
